<compile_context>
chip_gen: v6e
topology: v6e:2x2x1
jax: 0.10.0
libtpu: 0.0.40
codegen_flags: <defaults>
</compile_context>

<pallas_src>
import functools

import jax
import jax.numpy as jnp
from jax import lax
from jax.experimental import pallas as pl
from jax.experimental.pallas import tpu as pltpu


def _round_up(x, m):
    return ((x + m - 1) // m) * m


def _cdiv(a, b):
    return (a + b - 1) // b


# ---------------------------------------------------------------------------
# Kernels
# ---------------------------------------------------------------------------

def _resident_linear_kernel(x_ref, w_ref, b_ref, o_ref, *, compute_dtype):
    """Whole (padded) weight resident in VMEM: one full-K dot per row tile."""
    x = x_ref[...]
    w = w_ref[...]
    if compute_dtype is not None:
        if x.dtype != compute_dtype:
            x = x.astype(compute_dtype)
        if w.dtype != compute_dtype:
            w = w.astype(compute_dtype)
    # y = x @ W^T : contract x dim 1 with W (PyTorch [out, in]) dim 1.
    acc = lax.dot_general(
        x, w,
        dimension_numbers=(((1,), (1,)), ((), ())),
        preferred_element_type=jnp.float32,
    )
    o_ref[...] = (acc + b_ref[...].astype(jnp.float32)).astype(o_ref.dtype)


def _streamed_linear_kernel(x_ref, w_ref, b_ref, o_ref, acc_ref, *, compute_dtype):
    """Weight streamed in (tn, tk) tiles; f32 accumulator over the K grid axis."""
    k = pl.program_id(2)

    @pl.when(k == 0)
    def _():
        acc_ref[...] = jnp.zeros_like(acc_ref)

    x = x_ref[...]
    w = w_ref[...]
    if compute_dtype is not None:
        if x.dtype != compute_dtype:
            x = x.astype(compute_dtype)
        if w.dtype != compute_dtype:
            w = w.astype(compute_dtype)

    acc_ref[...] += lax.dot_general(
        x, w,
        dimension_numbers=(((1,), (1,)), ((), ())),
        preferred_element_type=jnp.float32,
    )

    @pl.when(k == pl.num_programs(2) - 1)
    def _():
        o_ref[...] = (acc_ref[...] + b_ref[...].astype(jnp.float32)).astype(o_ref.dtype)


# ---------------------------------------------------------------------------
# Tiling helpers
# ---------------------------------------------------------------------------

def _pick_row_tiling(m, tm_cap, min_tiles=1):
    """Row tile that keeps padding small (<= ~8 rows) and gives >= min_tiles steps."""
    mp8 = _round_up(max(m, 1), 8)
    n_tiles = max(min_tiles, _cdiv(mp8, max(8, tm_cap)))
    tm = _round_up(_cdiv(mp8, n_tiles), 8)
    return tm, tm * n_tiles, n_tiles


def _pick_feature_tile(hp, cap):
    for t in (512, 256, 128):
        if t <= cap and hp % t == 0:
            return t
    return hp


# ---------------------------------------------------------------------------
# Wrapper
# ---------------------------------------------------------------------------

def event_transform(x, weight, bias, *,
                    tm_max=512, tn_max=512, tk_max=512,
                    compute_dtype=None,
                    max_resident_weight_bytes=8 * 1024 * 1024,
                    vmem_budget_bytes=28 * 1024 * 1024):
    """y = x @ weight.T + bias  (PyTorch nn.Linear forward semantics).

    x:      [..., H]
    weight: [H, H]  (PyTorch layout: [out_features, in_features])
    bias:   [H]
    compute_dtype: optional (e.g. jnp.bfloat16) matmul operand dtype; the weight is
                   cast once in the wrapper, activations per-tile inside the kernel,
                   accumulation stays f32 and the output keeps x.dtype.
    """
    orig_shape = x.shape
    out_dtype = x.dtype
    H = orig_shape[-1]
    x2d = x.reshape(-1, H)
    M = x2d.shape[0]

    # Lane-dense feature padding; 256-multiples fill the 256-wide MXU on v6e/v7x.
    Hp = 128 if H <= 128 else _round_up(H, 256)

    x_bytes = x2d.dtype.itemsize
    w_dtype = jnp.dtype(compute_dtype) if compute_dtype is not None else weight.dtype
    w_bytes = w_dtype.itemsize
    o_bytes = jnp.dtype(out_dtype).itemsize
    b_bytes = bias.dtype.itemsize
    weight_total_bytes = Hp * Hp * w_bytes
    mp8 = _round_up(max(M, 1), 8)

    # ---- plan selection ------------------------------------------------------
    use_resident = weight_total_bytes <= max_resident_weight_bytes
    if use_resident:
        # >= 2 parallel row tiles whenever M allows (v7x has 2 TensorCores).
        min_tiles = 2 if mp8 >= 16 else 1
        tm_cap = tm_max
        while True:
            tm, Mp, _ = _pick_row_tiling(M, tm_cap, min_tiles)
            vmem_est = (2 * weight_total_bytes          # weight (double-buffer accounting)
                        + 2 * tm * Hp * x_bytes         # x tiles
                        + 2 * tm * Hp * o_bytes         # out tiles
                        + 2 * Hp * b_bytes)             # bias
            if vmem_est <= vmem_budget_bytes or tm <= 8:
                break
            tm_cap = max(8, tm_cap // 2)
        use_resident = vmem_est <= vmem_budget_bytes

    if use_resident:
        kernel = functools.partial(_resident_linear_kernel, compute_dtype=compute_dtype)
        grid = (Mp // tm,)
        in_specs = [
            pl.BlockSpec((tm, Hp), lambda i: (i, 0)),   # x row tile
            pl.BlockSpec((Hp, Hp), lambda i: (0, 0)),   # whole weight, DMA'd once
            pl.BlockSpec((1, Hp), lambda i: (0, 0)),    # whole bias, resident
        ]
        out_specs = pl.BlockSpec((tm, Hp), lambda i: (i, 0))
        scratch_shapes = []
        dim_sem = ("parallel",)
    else:
        tn = _pick_feature_tile(Hp, tn_max)
        tk = _pick_feature_tile(Hp, tk_max)
        min_tiles = 2 if (Hp // tn) == 1 and mp8 >= 16 else 1
        tm, Mp, _ = _pick_row_tiling(M, tm_max, min_tiles)
        kernel = functools.partial(_streamed_linear_kernel, compute_dtype=compute_dtype)
        grid = (Mp // tm, Hp // tn, Hp // tk)
        in_specs = [
            pl.BlockSpec((tm, tk), lambda i, j, k: (i, k)),   # x tile
            pl.BlockSpec((tn, tk), lambda i, j, k: (j, k)),   # W[out, in] tile
            pl.BlockSpec((1, tn), lambda i, j, k: (0, j)),    # bias tile (N-indexed)
        ]
        out_specs = pl.BlockSpec((tm, tn), lambda i, j, k: (i, j))
        scratch_shapes = [pltpu.VMEM((tm, tn), jnp.float32)]
        dim_sem = ("parallel", "parallel", "arbitrary")
        vmem_est = (2 * tm * tk * x_bytes + 2 * tn * tk * w_bytes
                    + 2 * tm * tn * o_bytes + tm * tn * 4 + 2 * tn * b_bytes)

    vmem_limit_bytes = min(56 * 1024 * 1024,
                           max(32 * 1024 * 1024, int(vmem_est) + 4 * 1024 * 1024))

    # ---- padding (single pad per array; no-op for already aligned shapes) -----
    if (Mp, Hp) != (M, H):
        x2d = jnp.pad(x2d, ((0, Mp - M), (0, Hp - H)))
    w2d = weight if compute_dtype is None else weight.astype(compute_dtype)
    b1d = bias
    if Hp != H:
        w2d = jnp.pad(w2d, ((0, Hp - H), (0, Hp - H)))
        b1d = jnp.pad(b1d, ((0, Hp - H),))
    b2d = b1d.reshape(1, Hp)

    out = pl.pallas_call(
        kernel,
        out_shape=jax.ShapeDtypeStruct((Mp, Hp), out_dtype),
        grid_spec=pltpu.PrefetchScalarGridSpec(
            num_scalar_prefetch=0,
            grid=grid,
            in_specs=in_specs,
            out_specs=out_specs,
            scratch_shapes=scratch_shapes,
        ),
        compiler_params=pltpu.CompilerParams(
            dimension_semantics=dim_sem,
            vmem_limit_bytes=vmem_limit_bytes,
        ),
    )(x2d, w2d, b2d)

    return out[:M, :H].reshape(orig_shape)


# ---------------------------------------------------------------------------
# Self-test
# ---------------------------------------------------------------------------

if __name__ == "__main__":
    root = jax.random.PRNGKey(0)

    def make_inputs(key, batch, seq, hidden):
        kx, kw, kb = jax.random.split(key, 3)
        x = jax.random.normal(kx, (batch, seq, hidden), dtype=jnp.float32)
        bound = 1.0 / (hidden ** 0.5)
        w = jax.random.uniform(kw, (hidden, hidden), jnp.float32, -bound, bound)
        b = jax.random.uniform(kb, (hidden,), jnp.float32, -bound, bound)
        return x, w, b

    k1, k2 = jax.random.split(root, 2)

    # --- test 1: module-sized shapes, f32, resident-weight plan ---------------
    x, w, b = make_inputs(k1, 2, 8, 32)
    y = jax.block_until_ready(event_transform(x, w, b))
    y_ref = x @ w.T + b
    assert y.shape == (2, 8, 32)
    assert jnp.allclose(y, y_ref, atol=1e-5, rtol=1e-5)

    # --- test 2: forced streamed (tiled M/N/K accumulator) plan ----------------
    x2, w2, b2 = make_inputs(k2, 4, 32, 256)
    y2 = jax.block_until_ready(
        event_transform(x2, w2, b2, max_resident_weight_bytes=0,
                        tn_max=128, tk_max=128))
    y2_ref = x2 @ w2.T + b2
    assert jnp.allclose(y2, y2_ref, atol=1e-4, rtol=1e-4)

    # --- test 3: bf16 compute (in-kernel activation cast, f32 accumulation) ----
    y3 = jax.block_until_ready(event_transform(x2, w2, b2, compute_dtype=jnp.bfloat16))
    assert jnp.allclose(y3, y2_ref, atol=5e-2, rtol=5e-2)

    print("KERNEL_OK")
</pallas_src>

<mosaic_0001>
module attributes {stable_mosaic.version = 11 : i64} {
  func.func @_resident_linear_kernel(%arg0: i32, %arg1: memref<8x128xf32, #tpu.memory_space<vmem>>, %arg2: memref<128x128xf32, #tpu.memory_space<vmem>>, %arg3: memref<1x128xf32, #tpu.memory_space<vmem>>, %arg4: memref<8x128xf32, #tpu.memory_space<vmem>>) attributes {dimension_semantics = [#tpu.dimension_semantics<parallel>], iteration_bounds = array<i64: 2>, scalar_prefetch = 0 : i64, scratch_operands = 0 : i64, tpu.core_type = #tpu.core_type<tc>, window_params = [{transform_indices = @transform_0, window_bounds = array<i64: 8, 128>}, {pipeline_mode = #tpu.pipeline_mode<synchronous>, transform_indices = @transform_1, window_bounds = array<i64: 128, 128>}, {pipeline_mode = #tpu.pipeline_mode<synchronous>, transform_indices = @transform_2, window_bounds = array<i64: 1, 128>}, {transform_indices = @transform_3, window_bounds = array<i64: 8, 128>}]} {
    %c0 = arith.constant 0 : index
    %c0_0 = arith.constant 0 : index
    %0 = vector.load %arg1[%c0, %c0_0] : memref<8x128xf32, #tpu.memory_space<vmem>>, vector<8x128xf32>
    %c0_1 = arith.constant 0 : index
    %c0_2 = arith.constant 0 : index
    %1 = vector.load %arg2[%c0_1, %c0_2] : memref<128x128xf32, #tpu.memory_space<vmem>>, vector<128x128xf32>
    %cst = arith.constant dense<0.000000e+00> : vector<8x128xf32>
    %2 = tpu.matmul %0, %1, %cst {dimension_numbers = #tpu.dot_dimension_numbers<[1], [1], [0], [0], [0, 0, 1, 0], [], []>} : vector<8x128xf32>, vector<128x128xf32>, vector<8x128xf32> -> vector<8x128xf32>
    %c0_3 = arith.constant 0 : index
    %c0_4 = arith.constant 0 : index
    %3 = vector.load %arg3[%c0_3, %c0_4] : memref<1x128xf32, #tpu.memory_space<vmem>>, vector<1x128xf32>
    %4 = vector.broadcast %3 : vector<1x128xf32> to vector<8x128xf32>
    %5 = arith.addf %2, %4 : vector<8x128xf32>
    %c0_5 = arith.constant 0 : index
    %c0_6 = arith.constant 0 : index
    %6 = vector.load %arg4[%c0_5, %c0_6] : memref<8x128xf32, #tpu.memory_space<vmem>>, vector<8x128xf32>
    tpu.vector_store %arg4[%c0_5, %c0_6], %5 {strides = array<i32>} : memref<8x128xf32, #tpu.memory_space<vmem>>, vector<8x128xf32>,
    return
  }
  func.func @transform_0(%arg0: i32) -> (i32, i32) {
    %c0_i32 = arith.constant 0 : i32
    %c0_i32_0 = arith.constant 0 : i32
    return %arg0, %c0_i32 : i32, i32
  }
  func.func @transform_1(%arg0: i32) -> (i32, i32) {
    %c0_i32 = arith.constant 0 : i32
    %c0_i32_0 = arith.constant 0 : i32
    %c0_i32_1 = arith.constant 0 : i32
    return %c0_i32, %c0_i32_0 : i32, i32
  }
  func.func @transform_2(%arg0: i32) -> (i32, i32) {
    %c0_i32 = arith.constant 0 : i32
    %c0_i32_0 = arith.constant 0 : i32
    %c0_i32_1 = arith.constant 0 : i32
    return %c0_i32, %c0_i32_0 : i32, i32
  }
  func.func @transform_3(%arg0: i32) -> (i32, i32) {
    %c0_i32 = arith.constant 0 : i32
    %c0_i32_0 = arith.constant 0 : i32
    return %arg0, %c0_i32 : i32, i32
  }
}

</mosaic_0001>

<llo_original>
// kernel: tpu_custom_call.1
$region0: #{tpu_custom_call.1}
  #allocation0 [shape = 'u32[]', space=smem, size = 0x4, offset = 0x4, fixed_abs, tag = 'smem constant byte address 0x4 - core index']
  #allocation1 [shape = 'u32[144,128]{1,0:T(1,128)}', space=vmem, size = 0x12000, scoped, tag = 'internal scratch']
  %s0 = inlined_call_operand.hbm [shape: f32[16,128], index: 0, kind: input, shape index: {}]
  %s1 = inlined_call_operand.hbm [shape: f32[128,128], index: 1, kind: input, shape index: {}]
  %s2 = inlined_call_operand.vmem [shape: f32[1,128], index: 2, kind: input, shape index: {}]
  %s3 = inlined_call_operand.hbm [shape: f32[16,128], index: 3, kind: output, shape index: {}]
  %s4 = sld [smem:[#allocation0]]
  $region53: #{tpu_custom_call.1} parent=0
    _
  %s6 = ssub.s32 1, %s4
  %s7 = scalar_select 0, %s6, %s4
  $region1: #{tpu_custom_call.1} parent=0
    #allocation2 [shape = 'u8[8192]{0}', space=vmem, size = 0x2000, scoped, tag = 'input window, operand 0']
    #allocation3 [shape = 's32[2]{0}', space=sflag, size = 0x8, scoped, tag = 'scoped memory for tpu_custom_call.1']
    #allocation4 [shape = 's32[2]{0}', space=sflag, size = 0x8, scoped, tag = 'scoped memory for tpu_custom_call.1']
    #allocation5 [shape = 'u8[65536]{0}', space=vmem, size = 0x10000, scoped, tag = 'input window, operand 1, single buffered']
    #allocation6 [shape = 's32[1]{0}', space=sflag, size = 0x4, scoped, tag = 'scoped memory for tpu_custom_call.1']
    #allocation7 [shape = 'u8[8192]{0}', space=vmem, size = 0x2000, scoped, tag = 'output window, operand 0']
    %8 = vsyncpa [#allocation3], 0
    %s9 = scalar_lea.sflag [#allocation3], 1
    %10 = vsyncpa %s9, 0
    %11 = vsyncpa [#allocation6], 0
    %12 = vsyncpa [#allocation4], 0
    %s13 = scalar_lea.sflag [#allocation4], 1
    %14 = vsyncpa %s13, 0
    loop: start=0, step=1, limit=4
    $region2: #{tpu_custom_call.1} parent=1 // loop_pre_header
      _
    $region3: #{tpu_custom_call.1} parent=1 // loop_header
      %s16 = sphi 0, %s20
      %p17 = scmp.ge.s32.totalorder %s16, 4
      %s26 = sphi 0, %s28
      %s29 = sphi 0, %s26
      %s30 = sphi 0, %s29
      %s46 = sphi 0, %s30
      %s50 = sphi 0, %s50
      %s52 = sphi 0, %s50
      %s53 = sphi 0, %s52
      %s67 = sphi 0, %s53
      %s71 = sphi 0, %s71
      %s73 = sphi 0, %s71
      %s74 = sphi 0, %s73
      %s88 = sphi 0, %s74
      %s94 = sphi 0, %s96
      %s97 = sphi 0, %s94
      %s98 = sphi 0, %s97
      %s114 = sphi 0, %s98
    $region4: #{tpu_custom_call.1} parent=1 // loop_header_branch
      %19 = sbr.rel (%p17) target = $region8
    $region5: #{tpu_custom_call.1} parent=1 // loop_body
      %s21 = ssub.s32 %s16, 1
      %s22 = ssub.s32 %s16, 2
      %s23 = sadd.s32 %s16, 1
      %s24 = ssub.s32 %s16, %s23
      %p25 = scmp.eq.s32.totalorder %s24, 0
      %s27 = sadd.s32 %s26, 1
      %s28 = scalar_select %p25, %s26, %s27
      %p31 = pneg %p25
      %p32 = scmp.eq.s32.totalorder %s16, 1
      %p33 = por %p31, %p32
      %p34 = scmp.ne.s32.totalorder %s26, %s29
      %p35 = scmp.eq.s32.totalorder %s16, 0
      %p36 = por %p34, %p35
      %p37 = scmp.ne.s32.totalorder %s26, %s29
      %p38 = scmp.eq.s32.totalorder %s21, 1
      %p39 = por %p37, %p38
      %p40 = scmp.ne.s32.totalorder %s29, %s30
      %p41 = scmp.eq.s32.totalorder %s21, 0
      %p42 = por %p40, %p41
      %p43 = scmp.ne.s32.totalorder %s29, %s30
      %p44 = scmp.eq.s32.totalorder %s22, 1
      %p45 = por %p43, %p44
      %p47 = scmp.ne.s32.totalorder %s30, %s46
      %p48 = scmp.eq.s32.totalorder %s22, 0
      %p49 = por %p47, %p48
      %s51 = sadd.s32 %s50, 1
      %p54 = scmp.eq.s32.totalorder %s16, 1
      %p55 = scmp.ne.s32.totalorder %s50, %s52
      %p56 = scmp.eq.s32.totalorder %s16, 0
      %p57 = por %p55, %p56
      %p58 = scmp.ne.s32.totalorder %s50, %s52
      %p59 = scmp.eq.s32.totalorder %s21, 1
      %p60 = por %p58, %p59
      %p61 = scmp.ne.s32.totalorder %s52, %s53
      %p62 = scmp.eq.s32.totalorder %s21, 0
      %p63 = por %p61, %p62
      %p64 = scmp.ne.s32.totalorder %s52, %s53
      %p65 = scmp.eq.s32.totalorder %s22, 1
      %p66 = por %p64, %p65
      %p68 = scmp.ne.s32.totalorder %s53, %s67
      %p69 = scmp.eq.s32.totalorder %s22, 0
      %p70 = por %p68, %p69
      %s72 = sadd.s32 %s71, 1
      %p75 = scmp.eq.s32.totalorder %s16, 1
      %p76 = scmp.ne.s32.totalorder %s71, %s73
      %p77 = scmp.eq.s32.totalorder %s16, 0
      %p78 = por %p76, %p77
      %p79 = scmp.ne.s32.totalorder %s71, %s73
      %p80 = scmp.eq.s32.totalorder %s21, 1
      %p81 = por %p79, %p80
      %p82 = scmp.ne.s32.totalorder %s73, %s74
      %p83 = scmp.eq.s32.totalorder %s21, 0
      %p84 = por %p82, %p83
      %p85 = scmp.ne.s32.totalorder %s73, %s74
      %p86 = scmp.eq.s32.totalorder %s22, 1
      %p87 = por %p85, %p86
      %p89 = scmp.ne.s32.totalorder %s74, %s88
      %p90 = scmp.eq.s32.totalorder %s22, 0
      %p91 = por %p89, %p90
      %s92 = ssub.s32 %s16, %s23
      %p93 = scmp.eq.s32.totalorder %s92, 0
      %s95 = sadd.s32 %s94, 1
      %s96 = scalar_select %p93, %s94, %s95
      %p99 = pneg %p93
      %p100 = scmp.eq.s32.totalorder %s16, 1
      %p101 = por %p99, %p100
      %p102 = scmp.ne.s32.totalorder %s94, %s97
      %p103 = scmp.eq.s32.totalorder %s16, 0
      %p104 = por %p102, %p103
      %p105 = scmp.ne.s32.totalorder %s94, %s97
      %p106 = scmp.eq.s32.totalorder %s21, 1
      %p107 = por %p105, %p106
      %p108 = scmp.ne.s32.totalorder %s97, %s98
      %p109 = scmp.eq.s32.totalorder %s21, 0
      %p110 = por %p108, %p109
      %p111 = scmp.ne.s32.totalorder %s97, %s98
      %p112 = scmp.eq.s32.totalorder %s22, 1
      %p113 = por %p111, %p112
      %p115 = scmp.ne.s32.totalorder %s98, %s114
      %p116 = scmp.eq.s32.totalorder %s22, 0
      %p117 = por %p115, %p116
      %p118 = scmp.le.s32.totalorder 1, %s16
      %p119 = scmp.lt.s32.totalorder %s16, 3
      %p120 = pnand %p118, %p119
      %p121 = pneg %p120
      // Predicated region
      $region9: #{tpu_custom_call.1} parent=5 // pred_check
        _
      $region10: #{tpu_custom_call.1} parent=5 // pred_check_branch
        %123 = sbr.rel (%p120) target = $region12
      $region11: #{tpu_custom_call.1} parent=5 // pred_region
        %s124 = ssub.s32 %s16, 1
        // Predicated region
        $region13: #{tpu_custom_call.1} parent=11 // pred_check
          %p125 = pneg %p63
        $region14: #{tpu_custom_call.1} parent=11 // pred_check_branch
          %127 = sbr.rel (%p125) target = $region16
        $region15: #{tpu_custom_call.1} parent=11 // pred_region
          %s129 = ssub.s32 2048, 2048
          %130 = vsyncadd [#allocation6], %s129
          %s131 = sshll.u32 [#allocation5], 4
          %s132 = int_to_ptr.vmem [resolvable:$true] %s131
          %137 = dma.hbm_to_vmem [thread:$0]  %s1, 2048, %s132, [#allocation6], 128, 128, 8
        $region16: #{tpu_custom_call.1} parent=11 // pred_fallthru
          _
        // Predicated region
        $region17: #{tpu_custom_call.1} parent=11 // pred_check
          %p138 = pneg %p84
        $region18: #{tpu_custom_call.1} parent=11 // pred_check_branch
          %140 = sbr.rel (%p138) target = $region20
        $region19: #{tpu_custom_call.1} parent=11 // pred_region
          _
        $region20: #{tpu_custom_call.1} parent=11 // pred_fallthru
          _
      $region12: #{tpu_custom_call.1} parent=5 // pred_fallthru
        _
      %p141 = scmp.lt.s32.totalorder %s16, 2
      // Predicated region
      $region21: #{tpu_custom_call.1} parent=5 // pred_check
        %p142 = pneg %p141
      $region22: #{tpu_custom_call.1} parent=5 // pred_check_branch
        %144 = sbr.rel (%p142) target = $region24
      $region23: #{tpu_custom_call.1} parent=5 // pred_region
        // Predicated region
        $region25: #{tpu_custom_call.1} parent=23 // pred_check
          %p145 = pneg %p36
        $region26: #{tpu_custom_call.1} parent=23 // pred_check_branch
          %147 = sbr.rel (%p145) target = $region28
        $region27: #{tpu_custom_call.1} parent=23 // pred_region
          %s148 = sand.u32 %s26, 1
          %s149 = scalar_lea.sflag [#allocation3], %s148
          %s150 = sand.u32 %s26, 1
          %s151 = smul.addr %s150, 8
          %s152 = scalar_lea.vmem [#allocation2], %s151
          %s154 = ssub.s32 128, 128
          %155 = vsyncadd %s149, %s154
          %s156 = smul.addr %s16, 128
          %s157 = scalar_lea.hbm %s0, %s156
          %s159 = sshll.u32 %s152, 4
          %s160 = int_to_ptr.vmem [resolvable:$true] %s159
          %162 = dma.hbm_to_vmem [thread:$0]  %s157, 128, %s160, %s149
        $region28: #{tpu_custom_call.1} parent=23 // pred_fallthru
          _
      $region24: #{tpu_custom_call.1} parent=5 // pred_fallthru
        _
      %p163 = scmp.le.s32.totalorder 1, %s16
      %p164 = scmp.lt.s32.totalorder %s16, 3
      %p165 = pnand %p163, %p164
      %p166 = pneg %p165
      // Predicated region
      $region29: #{tpu_custom_call.1} parent=5 // pred_check
        _
      $region30: #{tpu_custom_call.1} parent=5 // pred_check_branch
        %168 = sbr.rel (%p165) target = $region32
      $region31: #{tpu_custom_call.1} parent=5 // pred_region
        %s169 = ssub.s32 %s16, 1
        %s170 = sand.u32 %s29, 1
        %s171 = scalar_lea.sflag [#allocation3], %s170
        %s172 = sand.u32 %s29, 1
        %s173 = smul.addr %s172, 8
        %s174 = scalar_lea.vmem [#allocation2], %s173
        // Predicated region
        $region33: #{tpu_custom_call.1} parent=31 // pred_check
          %p175 = pneg %p42
        $region34: #{tpu_custom_call.1} parent=31 // pred_check_branch
          %177 = sbr.rel (%p175) target = $region36
        $region35: #{tpu_custom_call.1} parent=31 // pred_region
          %178 = dma.done %s171, 128
        $region36: #{tpu_custom_call.1} parent=31 // pred_fallthru
          _
        // Predicated region
        $region37: #{tpu_custom_call.1} parent=31 // pred_check
          %p179 = pneg %p63
        $region38: #{tpu_custom_call.1} parent=31 // pred_check_branch
          %181 = sbr.rel (%p179) target = $region40
        $region39: #{tpu_custom_call.1} parent=31 // pred_region
          %182 = dma.done [#allocation6], 2048
        $region40: #{tpu_custom_call.1} parent=31 // pred_fallthru
          _
        %s183 = sand.u32 %s29, 1
        %s184 = scalar_lea.sflag [#allocation3], %s183
        %s185 = sand.u32 %s29, 1
        %s186 = smul.addr %s185, 8
        %s187 = scalar_lea.vmem [#allocation2], %s186
        %p188 = pneg %p42
        %p189 = pneg %p39
        %p190 = pneg %p63
        %p191 = pneg %p60
        %p192 = pneg %p84
        %p193 = pneg %p81
        %p194 = pneg %p110
        %p195 = pneg %p107
        %s196 = sand.u32 %s97, 1
        %s197 = scalar_lea.sflag [#allocation4], %s196
        %s198 = sand.u32 %s97, 1
        %s199 = smul.addr %s198, 8
        %s200 = scalar_lea.vmem [#allocation7], %s199
        %v201 = vld [vmem:[%s174] sm:$0xff]
        %v202 = vld [vmem:[#allocation5] sm:$0xff]
        %v203 = vld [vmem:[#allocation5 + $0x8] sm:$0xff]
        %v204 = vld [vmem:[#allocation5 + $0x10] sm:$0xff]
        %v205 = vld [vmem:[#allocation5 + $0x18] sm:$0xff]
        %v206 = vld [vmem:[#allocation5 + $0x20] sm:$0xff]
        %v207 = vld [vmem:[#allocation5 + $0x28] sm:$0xff]
        %v208 = vld [vmem:[#allocation5 + $0x30] sm:$0xff]
        %v209 = vld [vmem:[#allocation5 + $0x38] sm:$0xff]
        %v210 = vld [vmem:[#allocation5 + $0x40] sm:$0xff]
        %v211 = vld [vmem:[#allocation5 + $0x48] sm:$0xff]
        %v212 = vld [vmem:[#allocation5 + $0x50] sm:$0xff]
        %v213 = vld [vmem:[#allocation5 + $0x58] sm:$0xff]
        %v214 = vld [vmem:[#allocation5 + $0x60] sm:$0xff]
        %v215 = vld [vmem:[#allocation5 + $0x68] sm:$0xff]
        %v216 = vld [vmem:[#allocation5 + $0x70] sm:$0xff]
        %v217 = vld [vmem:[#allocation5 + $0x78] sm:$0xff]
        %v218 = vld [vmem:[%s2] sm:$0x1]
        %v220 = vlaneseq
        %v221 = vshrl.u32 %v220, 7
        %v222 = vsub.s32 0, %v221
        %v223 = vrot.slane %v218, %v222
        %225 = vmatprep.subr.mxu0 0.0
        %226 = vmatpush1.xpose.msra.mxu0 %v217
        %227 = vmatprep.subr.mxu0 0.0
        %228 = vmatpush1.xpose.msra.mxu0 %v216
        %229 = vmatprep.subr.mxu0 0.0
        %230 = vmatpush1.xpose.msra.mxu0 %v215
        %231 = vmatprep.subr.mxu0 0.0
        %232 = vmatpush1.xpose.msra.mxu0 %v214
        %233 = vmatprep.subr.mxu0 0.0
        %234 = vmatpush1.xpose.msra.mxu0 %v213
        %235 = vmatprep.subr.mxu0 0.0
        %236 = vmatpush1.xpose.msra.mxu0 %v212
        %237 = vmatprep.subr.mxu0 0.0
        %238 = vmatpush1.xpose.msra.mxu0 %v211
        %239 = vmatprep.subr.mxu0 0.0
        %240 = vmatpush1.xpose.msra.mxu0 %v210
        %241 = vmatprep.subr.mxu0 0.0
        %242 = vmatpush1.xpose.msra.mxu0 %v209
        %243 = vmatprep.subr.mxu0 0.0
        %244 = vmatpush1.xpose.msra.mxu0 %v208
        %245 = vmatprep.subr.mxu0 0.0
        %246 = vmatpush1.xpose.msra.mxu0 %v207
        %247 = vmatprep.subr.mxu0 0.0
        %248 = vmatpush1.xpose.msra.mxu0 %v206
        %249 = vmatprep.subr.mxu0 0.0
        %250 = vmatpush1.xpose.msra.mxu0 %v205
        %251 = vmatprep.subr.mxu0 0.0
        %252 = vmatpush1.xpose.msra.mxu0 %v204
        %253 = vmatprep.subr.mxu0 0.0
        %254 = vmatpush1.xpose.msra.mxu0 %v203
        %255 = vmatprep.subr.mxu0 0.0
        %256 = vmatpush1.xpose.msra.mxu0 %v202
        %257 = vmatprep.subr.mxu0 0.0
        %258 = vmatpush2.xpose.msra.mxu0 0.0
        %259 = vmatprep.subr.mxu0 0.0
        %260 = vmatpush2.xpose.msra.mxu0 0.0
        %261 = vmatprep.subr.mxu0 0.0
        %262 = vmatpush2.xpose.msra.mxu0 0.0
        %263 = vmatprep.subr.mxu0 0.0
        %264 = vmatpush2.xpose.msra.mxu0 0.0
        %265 = vmatprep.subr.mxu0 0.0
        %266 = vmatpush2.xpose.msra.mxu0 0.0
        %267 = vmatprep.subr.mxu0 0.0
        %268 = vmatpush2.xpose.msra.mxu0 0.0
        %269 = vmatprep.subr.mxu0 0.0
        %270 = vmatpush2.xpose.msra.mxu0 0.0
        %271 = vmatprep.subr.mxu0 0.0
        %272 = vmatpush2.xpose.msra.mxu0 0.0
        %273 = vmatprep.subr.mxu0 0.0
        %274 = vmatpush2.xpose.msra.mxu0 0.0
        %275 = vmatprep.subr.mxu0 0.0
        %276 = vmatpush2.xpose.msra.mxu0 0.0
        %277 = vmatprep.subr.mxu0 0.0
        %278 = vmatpush2.xpose.msra.mxu0 0.0
        %279 = vmatprep.subr.mxu0 0.0
        %280 = vmatpush2.xpose.msra.mxu0 0.0
        %281 = vmatprep.subr.mxu0 0.0
        %282 = vmatpush2.xpose.msra.mxu0 0.0
        %283 = vmatprep.subr.mxu0 0.0
        %284 = vmatpush2.xpose.msra.mxu0 0.0
        %285 = vmatprep.subr.mxu0 0.0
        %286 = vmatpush2.xpose.msra.mxu0 0.0
        %287 = vmatprep.subr.mxu0 0.0
        %288 = vmatpush2.xpose.msra.mxu0 0.0
        %289 = vmatprep.mubr.f32.mxu0 0.0
        %290 = vmatmul.mubr.f32.gmra.mxu0 %v201
        %v291 = vpop.f32.mrf.mxu0
        %v292 = vadd.f32 %v223, %v291
        %v293 = vpop.f32.mrf.mxu0
        %294 = vdwg.mxu0
        %295 = vst [vmem:[%s200] sm:$0xff] %v292
        %s296 = sand.u32 %s97, 1
        %s297 = scalar_lea.sflag [#allocation4], %s296
        %s298 = sand.u32 %s97, 1
        %s299 = smul.addr %s298, 8
        %s300 = scalar_lea.vmem [#allocation7], %s299
        // Predicated region
        $region41: #{tpu_custom_call.1} parent=31 // pred_check
          %p301 = pneg %p107
        $region42: #{tpu_custom_call.1} parent=31 // pred_check_branch
          %303 = sbr.rel (%p301) target = $region44
        $region43: #{tpu_custom_call.1} parent=31 // pred_region
          %s305 = ssub.s32 128, 128
          %306 = vsyncadd %s297, %s305
          %s307 = smul.addr %s21, 128
          %s308 = scalar_lea.hbm %s3, %s307
          %s310 = sshll.u32 %s300, 4
          %s311 = int_to_ptr.vmem [resolvable:$true] %s310
          %313 = dma.vmem_to_hbm [thread:$0]  %s311, 128, %s308, %s297
        $region44: #{tpu_custom_call.1} parent=31 // pred_fallthru
          _
      $region32: #{tpu_custom_call.1} parent=5 // pred_fallthru
        _
      %p314 = scmp.le.s32.totalorder 2, %s16
      // Predicated region
      $region45: #{tpu_custom_call.1} parent=5 // pred_check
        %p315 = pneg %p314
      $region46: #{tpu_custom_call.1} parent=5 // pred_check_branch
        %317 = sbr.rel (%p315) target = $region48
      $region47: #{tpu_custom_call.1} parent=5 // pred_region
        %s318 = ssub.s32 %s16, 2
        // Predicated region
        $region49: #{tpu_custom_call.1} parent=47 // pred_check
          %p319 = pneg %p113
        $region50: #{tpu_custom_call.1} parent=47 // pred_check_branch
          %321 = sbr.rel (%p319) target = $region52
        $region51: #{tpu_custom_call.1} parent=47 // pred_region
          %s322 = sand.u32 %s98, 1
          %s323 = scalar_lea.sflag [#allocation4], %s322
          %s324 = sand.u32 %s98, 1
          %s325 = smul.addr %s324, 8
          %s326 = scalar_lea.vmem [#allocation7], %s325
          %327 = dma.done %s323, 128
        $region52: #{tpu_custom_call.1} parent=47 // pred_fallthru
          _
      $region48: #{tpu_custom_call.1} parent=5 // pred_fallthru
        _
    $region6: #{tpu_custom_call.1} parent=1 // loop_footer
      %s20 = sadd.s32 1, %s16
    $region7: #{tpu_custom_call.1} parent=1 // loop_footer_branch
      %15 = sbr.rel target = $region3
    $region8: #{tpu_custom_call.1} parent=1 // loop_exit
      _
    %328 = vsyncpa [#allocation3], 1
    %s329 = scalar_lea.sflag [#allocation3], 1
    %330 = vsyncpa %s329, 1
    %331 = vsyncpa [#allocation6], 1
    %332 = vsyncpa [#allocation4], 1
    %s333 = scalar_lea.sflag [#allocation4], 1
    %334 = vsyncpa %s333, 1

</llo_original>
